<compile_context>
chip_gen: v6e
topology: v6e:2x2x1
jax: 0.10.0
libtpu: 0.0.40
codegen_flags: <defaults>
</compile_context>

<pallas_src>
import functools

import jax
import jax.numpy as jnp
from jax.experimental import pallas as pl
from jax.experimental.pallas import tpu as pltpu

HIDDEN = 64            # per-subnet hidden width
FUSED = 2 * HIDDEN     # rows [0:64] = scale-net, rows [64:128] = translate-net


def _coupling_kernel(x_ref, w1_ref, b1_ref, w2_ref, b2_ref, y_ref, scale_ref,
                     *, reverse: bool):
    x = x_ref[...]                    # (1, TB)   batch on lanes
    w1 = w1_ref[...]                  # (128, 1)  fused first-layer weights (hidden on sublanes)
    b1 = b1_ref[...]                  # (128, 1)  fused first-layer biases
    w2 = w2_ref[...]                  # (128, 1)  fused second-layer weights

    # Fused layer 1 as a VPU broadcast MAC + ReLU, with the second-layer weight folded in:
    #   h[j, b] = relu(w1[j] * x[b] + b1[j]) * w2[j]
    h = jnp.maximum(w1 * x + b1, 0.0) * w2                                 # (128, TB)

    # Layer 2: cheap sublane reductions over the two halves of the fused hidden block.
    pre_s = jnp.sum(h[:HIDDEN, :], axis=0, keepdims=True) + b2_ref[0]      # (1, TB)
    trans = jnp.sum(h[HIDDEN:, :], axis=0, keepdims=True) + b2_ref[1]      # (1, TB)

    scale = jnp.tanh(pre_s)                                                # EUP
    if not reverse:
        y = x * jnp.exp(scale) + trans
    else:
        y = (x - trans) * jnp.exp(-scale)

    y_ref[...] = y.astype(y_ref.dtype)
    scale_ref[...] = scale.astype(scale_ref.dtype)


def pack_params(params):
    """Pack the 8 per-subnet arrays into 4 fused operands. Call once, outside the hot path."""
    w1 = jnp.concatenate([params["w1s"].reshape(HIDDEN),
                          params["w1t"].reshape(HIDDEN)]).reshape(FUSED, 1)
    b1 = jnp.concatenate([params["b1s"].reshape(HIDDEN),
                          params["b1t"].reshape(HIDDEN)]).reshape(FUSED, 1)
    w2 = jnp.concatenate([params["w2s"].reshape(HIDDEN),
                          params["w2t"].reshape(HIDDEN)]).reshape(FUSED, 1)
    b2 = jnp.concatenate([params["b2s"].reshape(1),
                          params["b2t"].reshape(1)])          # (2,) scalars -> SMEM
    return {"w1": w1, "b1": b1, "w2": w2, "b2": b2}


def coupling_layer_forward(x, packed, reverse=False, tb=512):
    """x: (B, 1) float32. packed: dict from pack_params(). Returns (y, scale), each (B, 1)."""
    B = x.shape[0]
    assert x.shape == (B, 1)

    # Lane-dense batch tile: TB must be a multiple of 128; clamp for tiny batches.
    tb = max(128, (min(tb, 128 * pl.cdiv(B, 128)) // 128) * 128)
    B_pad = tb * pl.cdiv(B, tb)
    grid = (B_pad // tb,)

    # Batch goes to lanes; pad the tail (padding rows compute finite garbage, trimmed below).
    x_lanes = jnp.pad(x.reshape(-1), (0, B_pad - B)).reshape(1, B_pad)

    kernel = functools.partial(_coupling_kernel, reverse=reverse)
    row_spec = pl.BlockSpec((1, tb), lambda i: (0, i))          # lane-dense batch tiles
    wgt_spec = pl.BlockSpec((FUSED, 1), lambda i: (0, 0))       # VMEM-resident across the grid

    y_l, scale_l = pl.pallas_call(
        kernel,
        out_shape=(
            jax.ShapeDtypeStruct((1, B_pad), x.dtype),
            jax.ShapeDtypeStruct((1, B_pad), x.dtype),
        ),
        grid=grid,
        in_specs=[
            row_spec,                                            # x
            wgt_spec, wgt_spec, wgt_spec,                        # w1, b1, w2 (fused)
            pl.BlockSpec(memory_space=pltpu.MemorySpace.SMEM),   # b2 scalars
        ],
        out_specs=(row_spec, row_spec),
        compiler_params=pltpu.CompilerParams(
            dimension_semantics=("parallel",)),
    )(x_lanes, packed["w1"], packed["b1"], packed["w2"], packed["b2"])

    y = y_l.reshape(-1)[:B].reshape(B, 1)
    scale = scale_l.reshape(-1)[:B].reshape(B, 1)
    return y, scale


def init_params(key):
    """Deterministic init mimicking nn.Linear shapes (stored as (in, out) / (1, out))."""
    ks = jax.random.split(key, 8)
    u = lambda k, shape, bound: jax.random.uniform(
        k, shape, dtype=jnp.float32, minval=-bound, maxval=bound)
    # Linear(1, 64): fan_in = 1 -> bound 1.0 ; Linear(64, 1): fan_in = 64 -> bound 1/8
    return {
        "w1s": u(ks[0], (1, HIDDEN), 1.0),
        "b1s": u(ks[1], (1, HIDDEN), 1.0),
        "w2s": u(ks[2], (HIDDEN, 1), 1.0 / 8.0),
        "b2s": u(ks[3], (1, 1), 1.0 / 8.0),
        "w1t": u(ks[4], (1, HIDDEN), 1.0),
        "b1t": u(ks[5], (1, HIDDEN), 1.0),
        "w2t": u(ks[6], (HIDDEN, 1), 1.0 / 8.0),
        "b2t": u(ks[7], (1, 1), 1.0 / 8.0),
    }


def _reference(x, p, reverse=False):
    h_s = jnp.maximum(x @ p["w1s"] + p["b1s"], 0.0)
    scale = jnp.tanh(h_s @ p["w2s"] + p["b2s"])
    h_t = jnp.maximum(x @ p["w1t"] + p["b1t"], 0.0)
    trans = h_t @ p["w2t"] + p["b2t"]
    if not reverse:
        y = x * jnp.exp(scale) + trans
    else:
        y = (x - trans) * jnp.exp(-scale)
    return y, scale


if __name__ == "__main__":
    key = jax.random.PRNGKey(0)
    k_params, k_x = jax.random.split(key)

    params = init_params(k_params)
    packed = pack_params(params)

    B = 8
    x = jax.random.normal(k_x, (B, 1), dtype=jnp.float32)

    # forward
    y, scale = coupling_layer_forward(x, packed, reverse=False)
    jax.block_until_ready((y, scale))
    y_ref, scale_ref = _reference(x, params, reverse=False)
    assert jnp.allclose(y, y_ref, atol=1e-5, rtol=1e-5), "y mismatch vs reference"
    assert jnp.allclose(scale, scale_ref, atol=1e-5, rtol=1e-5), "scale mismatch vs reference"

    # reverse
    y_r, scale_r = coupling_layer_forward(x, packed, reverse=True)
    jax.block_until_ready((y_r, scale_r))
    y_r_ref, scale_r_ref = _reference(x, params, reverse=True)
    assert jnp.allclose(y_r, y_r_ref, atol=1e-5, rtol=1e-5), "reverse y mismatch vs reference"
    assert jnp.allclose(scale_r, scale_r_ref, atol=1e-5, rtol=1e-5), "reverse scale mismatch"

    print("KERNEL_OK")
</pallas_src>

<mosaic_0001>
module attributes {stable_mosaic.version = 11 : i64} {
  func.func @_coupling_kernel(%arg0: i32, %arg1: memref<1x128xf32, #tpu.memory_space<vmem>>, %arg2: memref<128x1xf32, #tpu.memory_space<vmem>>, %arg3: memref<128x1xf32, #tpu.memory_space<vmem>>, %arg4: memref<128x1xf32, #tpu.memory_space<vmem>>, %arg5: memref<2xf32, #tpu.memory_space<smem>>, %arg6: memref<1x128xf32, #tpu.memory_space<vmem>>, %arg7: memref<1x128xf32, #tpu.memory_space<vmem>>) attributes {dimension_semantics = [#tpu.dimension_semantics<parallel>], iteration_bounds = array<i64: 1>, scalar_prefetch = 0 : i64, scratch_operands = 0 : i64, tpu.core_type = #tpu.core_type<tc>, window_params = [{transform_indices = @transform_0, window_bounds = array<i64: 1, 128>}, {pipeline_mode = #tpu.pipeline_mode<synchronous>, transform_indices = @transform_1, window_bounds = array<i64: 128, 1>}, {pipeline_mode = #tpu.pipeline_mode<synchronous>, transform_indices = @transform_2, window_bounds = array<i64: 128, 1>}, {pipeline_mode = #tpu.pipeline_mode<synchronous>, transform_indices = @transform_3, window_bounds = array<i64: 128, 1>}, {transform_indices = @transform_4, window_bounds = array<i64: 2>}, {transform_indices = @transform_5, window_bounds = array<i64: 1, 128>}, {transform_indices = @transform_6, window_bounds = array<i64: 1, 128>}]} {
    %c0 = arith.constant 0 : index
    %c0_0 = arith.constant 0 : index
    %0 = vector.load %arg1[%c0, %c0_0] : memref<1x128xf32, #tpu.memory_space<vmem>>, vector<1x128xf32>
    %c0_1 = arith.constant 0 : index
    %c0_2 = arith.constant 0 : index
    %1 = vector.load %arg2[%c0_1, %c0_2] : memref<128x1xf32, #tpu.memory_space<vmem>>, vector<128x1xf32>
    %c0_3 = arith.constant 0 : index
    %c0_4 = arith.constant 0 : index
    %2 = vector.load %arg3[%c0_3, %c0_4] : memref<128x1xf32, #tpu.memory_space<vmem>>, vector<128x1xf32>
    %c0_5 = arith.constant 0 : index
    %c0_6 = arith.constant 0 : index
    %3 = vector.load %arg4[%c0_5, %c0_6] : memref<128x1xf32, #tpu.memory_space<vmem>>, vector<128x1xf32>
    %4 = vector.broadcast %1 : vector<128x1xf32> to vector<128x128xf32>
    %5 = vector.broadcast %0 : vector<1x128xf32> to vector<128x128xf32>
    %6 = arith.mulf %4, %5 : vector<128x128xf32>
    %7 = vector.broadcast %2 : vector<128x1xf32> to vector<128x128xf32>
    %8 = arith.addf %6, %7 : vector<128x128xf32>
    %cst = arith.constant 0.000000e+00 : f32
    %9 = vector.broadcast %cst : f32 to vector<128x128xf32>
    %10 = arith.maximumf %8, %9 : vector<128x128xf32>
    %11 = vector.broadcast %3 : vector<128x1xf32> to vector<128x128xf32>
    %12 = arith.mulf %10, %11 : vector<128x128xf32>
    %13 = vector.extract_strided_slice %12 {offsets = [0, 0], sizes = [64, 128], strides = [1, 1]} : vector<128x128xf32> to vector<64x128xf32>
    %cst_7 = arith.constant dense<0.000000e+00> : vector<128xf32>
    %14 = vector.multi_reduction <add>, %13, %cst_7 [0] : vector<64x128xf32> to vector<128xf32>
    %15 = vector.shape_cast %14 : vector<128xf32> to vector<1x128xf32>
    %c0_8 = arith.constant 0 : index
    %16 = memref.load %arg5[%c0_8] : memref<2xf32, #tpu.memory_space<smem>>
    %17 = vector.broadcast %16 : f32 to vector<1x128xf32>
    %18 = arith.addf %15, %17 : vector<1x128xf32>
    %19 = vector.extract_strided_slice %12 {offsets = [64, 0], sizes = [64, 128], strides = [1, 1]} : vector<128x128xf32> to vector<64x128xf32>
    %cst_9 = arith.constant dense<0.000000e+00> : vector<128xf32>
    %20 = vector.multi_reduction <add>, %19, %cst_9 [0] : vector<64x128xf32> to vector<128xf32>
    %21 = vector.shape_cast %20 : vector<128xf32> to vector<1x128xf32>
    %c1 = arith.constant 1 : index
    %22 = memref.load %arg5[%c1] : memref<2xf32, #tpu.memory_space<smem>>
    %23 = vector.broadcast %22 : f32 to vector<1x128xf32>
    %24 = arith.addf %21, %23 : vector<1x128xf32>
    %25 = math.tanh %18 : vector<1x128xf32>
    %26 = math.exp %25 : vector<1x128xf32>
    %27 = arith.mulf %0, %26 : vector<1x128xf32>
    %28 = arith.addf %27, %24 : vector<1x128xf32>
    %c0_10 = arith.constant 0 : index
    %c0_11 = arith.constant 0 : index
    %29 = vector.load %arg6[%c0_10, %c0_11] : memref<1x128xf32, #tpu.memory_space<vmem>>, vector<1x128xf32>
    tpu.vector_store %arg6[%c0_10, %c0_11], %28 {strides = array<i32>} : memref<1x128xf32, #tpu.memory_space<vmem>>, vector<1x128xf32>,
    %c0_12 = arith.constant 0 : index
    %c0_13 = arith.constant 0 : index
    %30 = vector.load %arg7[%c0_12, %c0_13] : memref<1x128xf32, #tpu.memory_space<vmem>>, vector<1x128xf32>
    tpu.vector_store %arg7[%c0_12, %c0_13], %25 {strides = array<i32>} : memref<1x128xf32, #tpu.memory_space<vmem>>, vector<1x128xf32>,
    return
  }
  func.func @transform_0(%arg0: i32) -> (i32, i32) {
    %c0_i32 = arith.constant 0 : i32
    %c0_i32_0 = arith.constant 0 : i32
    return %c0_i32, %arg0 : i32, i32
  }
  func.func @transform_1(%arg0: i32) -> (i32, i32) {
    %c0_i32 = arith.constant 0 : i32
    %c0_i32_0 = arith.constant 0 : i32
    %c0_i32_1 = arith.constant 0 : i32
    return %c0_i32, %c0_i32_0 : i32, i32
  }
  func.func @transform_2(%arg0: i32) -> (i32, i32) {
    %c0_i32 = arith.constant 0 : i32
    %c0_i32_0 = arith.constant 0 : i32
    %c0_i32_1 = arith.constant 0 : i32
    return %c0_i32, %c0_i32_0 : i32, i32
  }
  func.func @transform_3(%arg0: i32) -> (i32, i32) {
    %c0_i32 = arith.constant 0 : i32
    %c0_i32_0 = arith.constant 0 : i32
    %c0_i32_1 = arith.constant 0 : i32
    return %c0_i32, %c0_i32_0 : i32, i32
  }
  func.func @transform_4(%arg0: i32) -> i32 {
    %c0_i32 = arith.constant 0 : i32
    %c0_i32_0 = arith.constant 0 : i32
    return %c0_i32 : i32
  }
  func.func @transform_5(%arg0: i32) -> (i32, i32) {
    %c0_i32 = arith.constant 0 : i32
    %c0_i32_0 = arith.constant 0 : i32
    return %c0_i32, %arg0 : i32, i32
  }
  func.func @transform_6(%arg0: i32) -> (i32, i32) {
    %c0_i32 = arith.constant 0 : i32
    %c0_i32_0 = arith.constant 0 : i32
    return %c0_i32, %arg0 : i32, i32
  }
}

</mosaic_0001>

<llo_original>
// kernel: tpu_custom_call.1
$region0: #{tpu_custom_call.1}
  #allocation0 [shape = 'u32[]', space=smem, size = 0x4, offset = 0x4, fixed_abs, tag = 'smem constant byte address 0x4 - core index']
  #allocation1 [shape = 'u32[144,128]{1,0:T(1,128)}', space=vmem, size = 0x12000, scoped, tag = 'internal scratch']
  %s0 = inlined_call_operand.vmem [shape: f32[1,128], index: 0, kind: input, shape index: {}]
  %s1 = inlined_call_operand.vmem [shape: f32[128,1], index: 1, kind: input, shape index: {}]
  %s2 = inlined_call_operand.vmem [shape: f32[128,1], index: 2, kind: input, shape index: {}]
  %s3 = inlined_call_operand.vmem [shape: f32[128,1], index: 3, kind: input, shape index: {}]
  %s4 = inlined_call_operand.vmem [shape: f32[2], index: 4, kind: input, shape index: {}]
  %s5 = inlined_call_operand.hbm [shape: f32[1,128], index: 5, kind: output, shape index: {0}]
  %s6 = inlined_call_operand.hbm [shape: f32[1,128], index: 6, kind: output, shape index: {1}]
  %7 = xla_tuple %s5, %s6
  %s8 = sld [smem:[#allocation0]]
  $region42: #{tpu_custom_call.1} parent=0
    _
  %s10 = ssub.s32 1, %s8
  %s11 = scalar_select 0, %s10, %s8
  $region1: #{tpu_custom_call.1} parent=0
    #allocation2 [shape = 'u8[512]{0}', space=smem, size = 0x200, scoped, tag = 'input window, operand 4, single buffered']
    #allocation3 [shape = 's32[1]{0}', space=sflag, size = 0x4, scoped, tag = 'scoped memory for tpu_custom_call.1']
    #allocation4 [shape = 's32[1]{0}', space=sflag, size = 0x4, scoped, tag = 'scoped memory for tpu_custom_call.1']
    #allocation5 [shape = 'u8[512]{0}', space=vmem, size = 0x400, scoped, tag = 'output window, operand 0, single buffered']
    #allocation6 [shape = 'u8[512]{0}', space=vmem, size = 0x400, scoped, tag = 'output window, operand 1, single buffered']
    #allocation7 [shape = 's32[1]{0}', space=sflag, size = 0x4, scoped, tag = 'scoped memory for tpu_custom_call.1']
    %12 = vsyncpa [#allocation4], 0
    %13 = vsyncpa [#allocation3], 0
    %14 = vsyncpa [#allocation7], 0
    // Predicated region
    $region2: #{tpu_custom_call.1} parent=1 // pred_check
      _
    $region3: #{tpu_custom_call.1} parent=1 // pred_check_branch
      %16 = sbr.rel (0) target = $region5
    $region4: #{tpu_custom_call.1} parent=1 // pred_region
      _
    $region5: #{tpu_custom_call.1} parent=1 // pred_fallthru
      _
    // Predicated region
    $region6: #{tpu_custom_call.1} parent=1 // pred_check
      _
    $region7: #{tpu_custom_call.1} parent=1 // pred_check_branch
      %18 = sbr.rel (0) target = $region9
    $region8: #{tpu_custom_call.1} parent=1 // pred_region
      _
    $region9: #{tpu_custom_call.1} parent=1 // pred_fallthru
      _
    // Predicated region
    $region10: #{tpu_custom_call.1} parent=1 // pred_check
      _
    $region11: #{tpu_custom_call.1} parent=1 // pred_check_branch
      %20 = sbr.rel (0) target = $region13
    $region12: #{tpu_custom_call.1} parent=1 // pred_region
      _
    $region13: #{tpu_custom_call.1} parent=1 // pred_fallthru
      _
    // Predicated region
    $region14: #{tpu_custom_call.1} parent=1 // pred_check
      _
    $region15: #{tpu_custom_call.1} parent=1 // pred_check_branch
      %22 = sbr.rel (0) target = $region17
    $region16: #{tpu_custom_call.1} parent=1 // pred_region
      _
    $region17: #{tpu_custom_call.1} parent=1 // pred_fallthru
      _
    // Predicated region
    $region18: #{tpu_custom_call.1} parent=1 // pred_check
      _
    $region19: #{tpu_custom_call.1} parent=1 // pred_check_branch
      %24 = sbr.rel (0) target = $region21
    $region20: #{tpu_custom_call.1} parent=1 // pred_region
      %s26 = ssub.s32 16, 16
      %27 = vsyncadd [#allocation4], %s26
      %s29 = sshll.u32 %s4, 4
      %s30 = int_to_ptr.vmem [resolvable:$true] %s29
      %32 = dma.vmem_to_smem %s30, 16, [#allocation2], [#allocation4]
    $region21: #{tpu_custom_call.1} parent=1 // pred_fallthru
      _
    // Predicated region
    $region22: #{tpu_custom_call.1} parent=1 // pred_check
      _
    $region23: #{tpu_custom_call.1} parent=1 // pred_check_branch
      %34 = sbr.rel (0) target = $region25
    $region24: #{tpu_custom_call.1} parent=1 // pred_region
      %35 = dma.done [#allocation4], 16
    $region25: #{tpu_custom_call.1} parent=1 // pred_fallthru
      _
    %36 = sfence
    %v37 = vld [vmem:[%s0] sm:$0x1]
    %v38 = vld [vmem:[%s1] sm:$0xff]
    %v39 = vld [vmem:[%s1 + $0x8] sm:$0xff]
    %v40 = vld [vmem:[%s1 + $0x10] sm:$0xff]
    %v41 = vld [vmem:[%s1 + $0x18] sm:$0xff]
    %v42 = vld [vmem:[%s1 + $0x20] sm:$0xff]
    %v43 = vld [vmem:[%s1 + $0x28] sm:$0xff]
    %v44 = vld [vmem:[%s1 + $0x30] sm:$0xff]
    %v45 = vld [vmem:[%s1 + $0x38] sm:$0xff]
    %v46 = vld [vmem:[%s1 + $0x40] sm:$0xff]
    %v47 = vld [vmem:[%s1 + $0x48] sm:$0xff]
    %v48 = vld [vmem:[%s1 + $0x50] sm:$0xff]
    %v49 = vld [vmem:[%s1 + $0x58] sm:$0xff]
    %v50 = vld [vmem:[%s1 + $0x60] sm:$0xff]
    %v51 = vld [vmem:[%s1 + $0x68] sm:$0xff]
    %v52 = vld [vmem:[%s1 + $0x70] sm:$0xff]
    %v53 = vld [vmem:[%s1 + $0x78] sm:$0xff]
    %v54 = vld [vmem:[%s2] sm:$0xff]
    %v55 = vld [vmem:[%s2 + $0x8] sm:$0xff]
    %v56 = vld [vmem:[%s2 + $0x10] sm:$0xff]
    %v57 = vld [vmem:[%s2 + $0x18] sm:$0xff]
    %v58 = vld [vmem:[%s2 + $0x20] sm:$0xff]
    %v59 = vld [vmem:[%s2 + $0x28] sm:$0xff]
    %v60 = vld [vmem:[%s2 + $0x30] sm:$0xff]
    %v61 = vld [vmem:[%s2 + $0x38] sm:$0xff]
    %v62 = vld [vmem:[%s2 + $0x40] sm:$0xff]
    %v63 = vld [vmem:[%s2 + $0x48] sm:$0xff]
    %v64 = vld [vmem:[%s2 + $0x50] sm:$0xff]
    %v65 = vld [vmem:[%s2 + $0x58] sm:$0xff]
    %v66 = vld [vmem:[%s2 + $0x60] sm:$0xff]
    %v67 = vld [vmem:[%s2 + $0x68] sm:$0xff]
    %v68 = vld [vmem:[%s2 + $0x70] sm:$0xff]
    %v69 = vld [vmem:[%s2 + $0x78] sm:$0xff]
    %v70 = vld [vmem:[%s3] sm:$0xff]
    %v71 = vld [vmem:[%s3 + $0x8] sm:$0xff]
    %v72 = vld [vmem:[%s3 + $0x10] sm:$0xff]
    %v73 = vld [vmem:[%s3 + $0x18] sm:$0xff]
    %v74 = vld [vmem:[%s3 + $0x20] sm:$0xff]
    %v75 = vld [vmem:[%s3 + $0x28] sm:$0xff]
    %v76 = vld [vmem:[%s3 + $0x30] sm:$0xff]
    %v77 = vld [vmem:[%s3 + $0x38] sm:$0xff]
    %v78 = vld [vmem:[%s3 + $0x40] sm:$0xff]
    %v79 = vld [vmem:[%s3 + $0x48] sm:$0xff]
    %v80 = vld [vmem:[%s3 + $0x50] sm:$0xff]
    %v81 = vld [vmem:[%s3 + $0x58] sm:$0xff]
    %v82 = vld [vmem:[%s3 + $0x60] sm:$0xff]
    %v83 = vld [vmem:[%s3 + $0x68] sm:$0xff]
    %v84 = vld [vmem:[%s3 + $0x70] sm:$0xff]
    %v85 = vld [vmem:[%s3 + $0x78] sm:$0xff]
    %87 = vset.pattern.permute.xlu0 0
    %88 = vperm.xlu0 %87, %v38
    %v89 = vpop.permute.xlu0 %88
    %92 = vset.pattern.permute.xlu0 0
    %93 = vperm.xlu0 %92, %v39
    %v94 = vpop.permute.xlu0 %93
    %97 = vset.pattern.permute.xlu0 0
    %98 = vperm.xlu0 %97, %v40
    %v99 = vpop.permute.xlu0 %98
    %102 = vset.pattern.permute.xlu0 0
    %103 = vperm.xlu0 %102, %v41
    %v104 = vpop.permute.xlu0 %103
    %107 = vset.pattern.permute.xlu0 0
    %108 = vperm.xlu0 %107, %v42
    %v109 = vpop.permute.xlu0 %108
    %112 = vset.pattern.permute.xlu0 0
    %113 = vperm.xlu0 %112, %v43
    %v114 = vpop.permute.xlu0 %113
    %117 = vset.pattern.permute.xlu0 0
    %118 = vperm.xlu0 %117, %v44
    %v119 = vpop.permute.xlu0 %118
    %122 = vset.pattern.permute.xlu0 0
    %123 = vperm.xlu0 %122, %v45
    %v124 = vpop.permute.xlu0 %123
    %127 = vset.pattern.permute.xlu0 0
    %128 = vperm.xlu0 %127, %v46
    %v129 = vpop.permute.xlu0 %128
    %132 = vset.pattern.permute.xlu0 0
    %133 = vperm.xlu0 %132, %v47
    %v134 = vpop.permute.xlu0 %133
    %137 = vset.pattern.permute.xlu0 0
    %138 = vperm.xlu0 %137, %v48
    %v139 = vpop.permute.xlu0 %138
    %142 = vset.pattern.permute.xlu0 0
    %143 = vperm.xlu0 %142, %v49
    %v144 = vpop.permute.xlu0 %143
    %147 = vset.pattern.permute.xlu0 0
    %148 = vperm.xlu0 %147, %v50
    %v149 = vpop.permute.xlu0 %148
    %152 = vset.pattern.permute.xlu0 0
    %153 = vperm.xlu0 %152, %v51
    %v154 = vpop.permute.xlu0 %153
    %157 = vset.pattern.permute.xlu0 0
    %158 = vperm.xlu0 %157, %v52
    %v159 = vpop.permute.xlu0 %158
    %162 = vset.pattern.permute.xlu0 0
    %163 = vperm.xlu0 %162, %v53
    %v164 = vpop.permute.xlu0 %163
    %v167 = vlaneseq
    %v168 = vshrl.u32 %v167, 7
    %v169 = vsub.s32 0, %v168
    %v170 = vrot.slane %v37, %v169
    %v172 = vmul.f32 %v89, %v170
    %v173 = vmul.f32 %v94, %v170
    %v174 = vmul.f32 %v99, %v170
    %v175 = vmul.f32 %v104, %v170
    %v176 = vmul.f32 %v109, %v170
    %v177 = vmul.f32 %v114, %v170
    %v178 = vmul.f32 %v119, %v170
    %v179 = vmul.f32 %v124, %v170
    %v180 = vmul.f32 %v129, %v170
    %v181 = vmul.f32 %v134, %v170
    %v182 = vmul.f32 %v139, %v170
    %v183 = vmul.f32 %v144, %v170
    %v184 = vmul.f32 %v149, %v170
    %v185 = vmul.f32 %v154, %v170
    %v186 = vmul.f32 %v159, %v170
    %v187 = vmul.f32 %v164, %v170
    %189 = vset.pattern.permute.xlu0 0
    %190 = vperm.xlu0 %189, %v54
    %v191 = vpop.permute.xlu0 %190
    %194 = vset.pattern.permute.xlu0 0
    %195 = vperm.xlu0 %194, %v55
    %v196 = vpop.permute.xlu0 %195
    %199 = vset.pattern.permute.xlu0 0
    %200 = vperm.xlu0 %199, %v56
    %v201 = vpop.permute.xlu0 %200
    %204 = vset.pattern.permute.xlu0 0
    %205 = vperm.xlu0 %204, %v57
    %v206 = vpop.permute.xlu0 %205
    %209 = vset.pattern.permute.xlu0 0
    %210 = vperm.xlu0 %209, %v58
    %v211 = vpop.permute.xlu0 %210
    %214 = vset.pattern.permute.xlu0 0
    %215 = vperm.xlu0 %214, %v59
    %v216 = vpop.permute.xlu0 %215
    %219 = vset.pattern.permute.xlu0 0
    %220 = vperm.xlu0 %219, %v60
    %v221 = vpop.permute.xlu0 %220
    %224 = vset.pattern.permute.xlu0 0
    %225 = vperm.xlu0 %224, %v61
    %v226 = vpop.permute.xlu0 %225
    %229 = vset.pattern.permute.xlu0 0
    %230 = vperm.xlu0 %229, %v62
    %v231 = vpop.permute.xlu0 %230
    %234 = vset.pattern.permute.xlu0 0
    %235 = vperm.xlu0 %234, %v63
    %v236 = vpop.permute.xlu0 %235
    %239 = vset.pattern.permute.xlu0 0
    %240 = vperm.xlu0 %239, %v64
    %v241 = vpop.permute.xlu0 %240
    %244 = vset.pattern.permute.xlu0 0
    %245 = vperm.xlu0 %244, %v65
    %v246 = vpop.permute.xlu0 %245
    %249 = vset.pattern.permute.xlu0 0
    %250 = vperm.xlu0 %249, %v66
    %v251 = vpop.permute.xlu0 %250
    %254 = vset.pattern.permute.xlu0 0
    %255 = vperm.xlu0 %254, %v67
    %v256 = vpop.permute.xlu0 %255
    %259 = vset.pattern.permute.xlu0 0
    %260 = vperm.xlu0 %259, %v68
    %v261 = vpop.permute.xlu0 %260
    %264 = vset.pattern.permute.xlu0 0
    %265 = vperm.xlu0 %264, %v69
    %v266 = vpop.permute.xlu0 %265
    %v268 = vadd.f32 %v172, %v191
    %v269 = vadd.f32 %v173, %v196
    %v270 = vadd.f32 %v174, %v201
    %v271 = vadd.f32 %v175, %v206
    %v272 = vadd.f32 %v176, %v211
    %v273 = vadd.f32 %v177, %v216
    %v274 = vadd.f32 %v178, %v221
    %v275 = vadd.f32 %v179, %v226
    %v276 = vadd.f32 %v180, %v231
    %v277 = vadd.f32 %v181, %v236
    %v278 = vadd.f32 %v182, %v241
    %v279 = vadd.f32 %v183, %v246
    %v280 = vadd.f32 %v184, %v251
    %v281 = vadd.f32 %v185, %v256
    %v282 = vadd.f32 %v186, %v261
    %v283 = vadd.f32 %v187, %v266
    %v284 = vmax.f32 %v268, 0.0
    %v285 = vmax.f32 %v269, 0.0
    %v286 = vmax.f32 %v270, 0.0
    %v287 = vmax.f32 %v271, 0.0
    %v288 = vmax.f32 %v272, 0.0
    %v289 = vmax.f32 %v273, 0.0
    %v290 = vmax.f32 %v274, 0.0
    %v291 = vmax.f32 %v275, 0.0
    %v292 = vmax.f32 %v276, 0.0
    %v293 = vmax.f32 %v277, 0.0
    %v294 = vmax.f32 %v278, 0.0
    %v295 = vmax.f32 %v279, 0.0
    %v296 = vmax.f32 %v280, 0.0
    %v297 = vmax.f32 %v281, 0.0
    %v298 = vmax.f32 %v282, 0.0
    %v299 = vmax.f32 %v283, 0.0
    %301 = vset.pattern.permute.xlu0 0
    %302 = vperm.xlu0 %301, %v70
    %v303 = vpop.permute.xlu0 %302
    %306 = vset.pattern.permute.xlu0 0
    %307 = vperm.xlu0 %306, %v71
    %v308 = vpop.permute.xlu0 %307
    %311 = vset.pattern.permute.xlu0 0
    %312 = vperm.xlu0 %311, %v72
    %v313 = vpop.permute.xlu0 %312
    %316 = vset.pattern.permute.xlu0 0
    %317 = vperm.xlu0 %316, %v73
    %v318 = vpop.permute.xlu0 %317
    %321 = vset.pattern.permute.xlu0 0
    %322 = vperm.xlu0 %321, %v74
    %v323 = vpop.permute.xlu0 %322
    %326 = vset.pattern.permute.xlu0 0
    %327 = vperm.xlu0 %326, %v75
    %v328 = vpop.permute.xlu0 %327
    %331 = vset.pattern.permute.xlu0 0
    %332 = vperm.xlu0 %331, %v76
    %v333 = vpop.permute.xlu0 %332
    %336 = vset.pattern.permute.xlu0 0
    %337 = vperm.xlu0 %336, %v77
    %v338 = vpop.permute.xlu0 %337
    %341 = vset.pattern.permute.xlu0 0
    %342 = vperm.xlu0 %341, %v78
    %v343 = vpop.permute.xlu0 %342
    %346 = vset.pattern.permute.xlu0 0
    %347 = vperm.xlu0 %346, %v79
    %v348 = vpop.permute.xlu0 %347
    %351 = vset.pattern.permute.xlu0 0
    %352 = vperm.xlu0 %351, %v80
    %v353 = vpop.permute.xlu0 %352
    %356 = vset.pattern.permute.xlu0 0
    %357 = vperm.xlu0 %356, %v81
    %v358 = vpop.permute.xlu0 %357
    %361 = vset.pattern.permute.xlu0 0
    %362 = vperm.xlu0 %361, %v82
    %v363 = vpop.permute.xlu0 %362
    %366 = vset.pattern.permute.xlu0 0
    %367 = vperm.xlu0 %366, %v83
    %v368 = vpop.permute.xlu0 %367
    %371 = vset.pattern.permute.xlu0 0
    %372 = vperm.xlu0 %371, %v84
    %v373 = vpop.permute.xlu0 %372
    %376 = vset.pattern.permute.xlu0 0
    %377 = vperm.xlu0 %376, %v85
    %v378 = vpop.permute.xlu0 %377
    %v380 = vmul.f32 %v284, %v303
    %v381 = vmul.f32 %v285, %v308
    %v382 = vmul.f32 %v286, %v313
    %v383 = vmul.f32 %v287, %v318
    %v384 = vmul.f32 %v288, %v323
    %v385 = vmul.f32 %v289, %v328
    %v386 = vmul.f32 %v290, %v333
    %v387 = vmul.f32 %v291, %v338
    %v388 = vmul.f32 %v292, %v343
    %v389 = vmul.f32 %v293, %v348
    %v390 = vmul.f32 %v294, %v353
    %v391 = vmul.f32 %v295, %v358
    %v392 = vmul.f32 %v296, %v363
    %v393 = vmul.f32 %v297, %v368
    %v394 = vmul.f32 %v298, %v373
    %v395 = vmul.f32 %v299, %v378
    %v396 = vadd.f32 %v380, %v381
    %v397 = vadd.f32 %v396, %v382
    %v398 = vadd.f32 %v397, %v383
    %v399 = vadd.f32 %v398, %v384
    %v400 = vadd.f32 %v399, %v385
    %v401 = vadd.f32 %v400, %v386
    %v402 = vadd.f32 %v401, %v387
    %v403 = vrot.slane %v402, 4
    %v404 = vadd.f32 %v402, %v403
    %v405 = vrot.slane %v404, 2
    %v406 = vadd.f32 %v404, %v405
    %v407 = vrot.slane %v406, 1
    %v408 = vadd.f32 %v406, %v407
    %s409 = sld [smem:[#allocation2]]
    %v410 = vstv %s409
    %v411 = vadd.f32 %v408, %v410
    %v412 = vadd.f32 %v388, %v389
    %v413 = vadd.f32 %v412, %v390
    %v414 = vadd.f32 %v413, %v391
    %v415 = vadd.f32 %v414, %v392
    %v416 = vadd.f32 %v415, %v393
    %v417 = vadd.f32 %v416, %v394
    %v418 = vadd.f32 %v417, %v395
    %v419 = vrot.slane %v418, 4
    %v420 = vadd.f32 %v418, %v419
    %v421 = vrot.slane %v420, 2
    %v422 = vadd.f32 %v420, %v421
    %v423 = vrot.slane %v422, 1
    %v424 = vadd.f32 %v422, %v423
    %s425 = sld [smem:[#allocation2 + $0x1]]
    %v426 = vstv %s425
    %v427 = vadd.f32 %v424, %v426
    %v428 = vtanh.pop %v411
    %v429 = vmul.f32 %v428, 1.442695
    %v430 = vpow.pop %v429
    %v431 = vmul.f32 %v37, %v430
    %v432 = vadd.f32 %v431, %v427
    %433 = vst [vmem:[#allocation5] sm:$0x1] %v432
    %434 = vst [vmem:[#allocation6] sm:$0x1] %v428
    // Predicated region
    $region26: #{tpu_custom_call.1} parent=1 // pred_check
      _
    $region27: #{tpu_custom_call.1} parent=1 // pred_check_branch
      %436 = sbr.rel (0) target = $region29
    $region28: #{tpu_custom_call.1} parent=1 // pred_region
      %s438 = ssub.s32 16, 16
      %439 = vsyncadd [#allocation3], %s438
      %s441 = sshll.u32 [#allocation5], 4
      %s442 = int_to_ptr.vmem [resolvable:$true] %s441
      %444 = dma.vmem_to_hbm [thread:$0]  %s442, 16, %s5, [#allocation3]
    $region29: #{tpu_custom_call.1} parent=1 // pred_fallthru
      _
    // Predicated region
    $region30: #{tpu_custom_call.1} parent=1 // pred_check
      _
    $region31: #{tpu_custom_call.1} parent=1 // pred_check_branch
      %446 = sbr.rel (0) target = $region33
    $region32: #{tpu_custom_call.1} parent=1 // pred_region
      %s448 = ssub.s32 16, 16
      %449 = vsyncadd [#allocation7], %s448
      %s451 = sshll.u32 [#allocation6], 4
      %s452 = int_to_ptr.vmem [resolvable:$true] %s451
      %454 = dma.vmem_to_hbm [thread:$0]  %s452, 16, %s6, [#allocation7]
    $region33: #{tpu_custom_call.1} parent=1 // pred_fallthru
      _
    // Predicated region
    $region34: #{tpu_custom_call.1} parent=1 // pred_check
      _
    $region35: #{tpu_custom_call.1} parent=1 // pred_check_branch
      %456 = sbr.rel (0) target = $region37
    $region36: #{tpu_custom_call.1} parent=1 // pred_region
      %457 = dma.done [#allocation3], 16
    $region37: #{tpu_custom_call.1} parent=1 // pred_fallthru
      _
    // Predicated region
    $region38: #{tpu_custom_call.1} parent=1 // pred_check
      _
    $region39: #{tpu_custom_call.1} parent=1 // pred_check_branch
      %459 = sbr.rel (0) target = $region41
    $region40: #{tpu_custom_call.1} parent=1 // pred_region
      %460 = dma.done [#allocation7], 16
    $region41: #{tpu_custom_call.1} parent=1 // pred_fallthru
      _
    %461 = vsyncpa [#allocation3], 1
    %462 = vsyncpa [#allocation7], 1
    %463 = vsyncpa [#allocation4], 1

</llo_original>
